<compile_context>
chip_gen: v6e
topology: v6e:2x2x1
jax: 0.10.0
libtpu: 0.0.40
codegen_flags: <defaults>
</compile_context>

<pallas_src>
import math
import functools

import jax
import jax.numpy as jnp
from jax.experimental import pallas as pl
from jax.experimental.pallas import tpu as pltpu


def _round_up(x, m):
    return ((x + m - 1) // m) * m


def _pe_kernel(tok_ref, const_ref, out_ref, *, pad_idx, eos_idx, n_special,
               height, width, scale):
    # tok_ref:   (TILE_G, LANE_W) int32 — each token replicated across its D lanes
    # const_ref: (3, LANE_W) f32 — rows: 2*pi*g[0], 2*pi*g[1], phase offset (0 | pi/2)
    # out_ref:   (TILE_G, LANE_W) — lane-dense output slab
    tok = tok_ref[...]
    valid = jnp.logical_and(tok != pad_idx, tok != eos_idx)

    actions = (tok - n_special).astype(jnp.float32)
    wos = float(width) / float(scale)
    half = float(scale // 2)
    q = jnp.floor(actions / wos)              # torch: actions // (width / scale)
    y = q + half
    x = actions - q * wos + half              # torch: actions %  (width / scale)

    # forward_pos(..., normalize=True): coords in [-1, 1]
    cx = x * (2.0 / float(width)) - 1.0
    cy = y * (2.0 / float(height)) - 1.0

    c = const_ref[...]
    # VPU outer-product (keep the K=2 contraction off the MXU); 2*pi is already
    # folded into c[0]/c[1]; the cos half is realized as sin(t + pi/2) via c[2].
    phase = cx * c[0:1, :] + cy * c[1:2, :] + c[2:3, :]
    pe = jnp.sin(phase)

    # pad / eos tokens (and padding rows) stay exactly zero,
    # like `pe[gaze_symbol_idx] = pe_valid` in the torch module.
    out_ref[...] = jnp.where(valid, pe, 0.0).astype(out_ref.dtype)


def position_embedding_random(tgt_seq, gaussian_matrix, *, pad_idx, eos_idx,
                              n_special, height, width, scale=1,
                              out_dtype=jnp.float32):
    """tgt_seq: (B, L) int32, gaussian_matrix: (2, d_model//2) f32 -> (B, L, d_model)."""
    # out_dtype=jnp.bfloat16 halves output HBM traffic if the consumer tolerates
    # it (compute stays f32 in-kernel; cast happens only at the store).
    B, L = tgt_seq.shape
    Dh = gaussian_matrix.shape[1]
    D = 2 * Dh
    N = B * L

    # ---- lane packing: R token rows per lane group (lane-dense stores) ------
    if D % 128 == 0:
        R = 1                          # already lane-dense
    elif 128 % D == 0:
        R = 128 // D                   # pack R rows side by side -> 128 lanes
    else:
        R = 1                          # TODO(synk): D not 128-friendly -> masked stores
    lane_w = R * D

    # ---- per-lane constant table, computed ONCE outside the kernel ----------
    g2pi = (2.0 * math.pi) * gaussian_matrix.astype(jnp.float32)       # (2, Dh)
    g0_pat = jnp.concatenate([g2pi[0], g2pi[0]])                       # (D,)
    g1_pat = jnp.concatenate([g2pi[1], g2pi[1]])                       # (D,)
    off_pat = jnp.concatenate([jnp.zeros((Dh,), jnp.float32),
                               jnp.full((Dh,), math.pi / 2.0, jnp.float32)])
    const = jnp.stack([jnp.tile(g0_pat, R),
                       jnp.tile(g1_pat, R),
                       jnp.tile(off_pat, R)])                          # (3, lane_w)

    # ---- coarse grid over lane groups ---------------------------------------
    G = pl.cdiv(N, R)                  # number of 128-lane groups
    g8 = _round_up(G, 8)
    if g8 <= 8:
        tile_g = g8                                  # tiny problem: one step
    elif g8 <= 2048:
        tile_g = _round_up(pl.cdiv(g8, 2), 8)        # 2 steps -> both v7x TCs busy
    else:
        tile_g = 1024                                # big: many parallel steps
    G_pad = _round_up(g8, tile_g)
    grid = (G_pad // tile_g,)

    # ---- tokens replicated across their D output lanes (layout plumbing) ----
    tok = tgt_seq.reshape(-1).astype(jnp.int32)
    tok = jnp.pad(tok, (0, G_pad * R - N), constant_values=pad_idx)    # pads -> masked to 0
    tok_rep = jnp.broadcast_to(tok.reshape(G_pad, R, 1),
                               (G_pad, R, D)).reshape(G_pad, lane_w)

    kernel = functools.partial(
        _pe_kernel, pad_idx=pad_idx, eos_idx=eos_idx, n_special=n_special,
        height=height, width=width, scale=scale)

    n_elems = G_pad * lane_w
    cost = pl.CostEstimate(
        flops=12 * n_elems,
        transcendentals=n_elems,
        bytes_accessed=2 * 4 * n_elems + 4 * 3 * lane_w)

    out = pl.pallas_call(
        kernel,
        out_shape=jax.ShapeDtypeStruct((G_pad, lane_w), out_dtype),
        grid_spec=pl.GridSpec(
            grid=grid,
            in_specs=[
                pl.BlockSpec((tile_g, lane_w), lambda g: (g, 0)),   # tokens
                pl.BlockSpec((3, lane_w), lambda g: (0, 0)),        # constants, resident
            ],
            out_specs=pl.BlockSpec((tile_g, lane_w), lambda g: (g, 0)),
        ),
        compiler_params=pltpu.CompilerParams(
            dimension_semantics=("parallel",)),
        cost_estimate=cost,
    )(tok_rep, const)

    # Free contiguous reshapes back to (B, L, D).
    return out.reshape(G_pad * R, D)[:N].reshape(B, L, D)


def _reference(tgt_seq, g, *, pad_idx, eos_idx, n_special, height, width, scale=1):
    valid = jnp.logical_and(tgt_seq != pad_idx, tgt_seq != eos_idx)
    actions = (tgt_seq - n_special).astype(jnp.float32)
    y = jnp.floor(actions / (width / scale)) + (scale // 2)
    x = jnp.mod(actions, (width / scale)) + (scale // 2)
    coords = jnp.stack([2.0 * (x / width) - 1.0, 2.0 * (y / height) - 1.0], axis=-1)
    proj = 2.0 * jnp.pi * (coords @ g)
    pe = jnp.concatenate([jnp.sin(proj), jnp.cos(proj)], axis=-1)
    return jnp.where(valid[..., None], pe, 0.0)


if __name__ == "__main__":
    # Module hyper-params (synthetic, deterministic)
    special_symbols = ["<pad>", "<bos>", "<eos>"]   # pa.special_symbols
    PAD_IDX, EOS_IDX = 0, 2                         # pa.pad_idx, pa.eos_idx
    N_SPECIAL = len(special_symbols)
    D_MODEL = 32                                    # -> self.d_model = 16, pe dim = 32
    HEIGHT, WIDTH = 20, 32
    GAUSS_SCALE = 1.0                               # scale=None -> 1.0

    B, L = 2, 8
    key = jax.random.PRNGKey(0)
    k_g, k_t = jax.random.split(key)

    # buffer: scale * randn((2, d_model // 2))
    gaussian = (GAUSS_SCALE *
                jax.random.normal(k_g, (2, D_MODEL // 2), dtype=jnp.float32))

    # tokens: mix of gaze actions plus some pad / eos entries
    tgt_seq = jax.random.randint(
        k_t, (B, L), minval=N_SPECIAL, maxval=N_SPECIAL + HEIGHT * WIDTH,
        dtype=jnp.int32)
    tgt_seq = tgt_seq.at[0, L - 1].set(EOS_IDX)
    tgt_seq = tgt_seq.at[1, L - 2].set(EOS_IDX)
    tgt_seq = tgt_seq.at[1, L - 1].set(PAD_IDX)

    out = position_embedding_random(
        tgt_seq, gaussian, pad_idx=PAD_IDX, eos_idx=EOS_IDX,
        n_special=N_SPECIAL, height=HEIGHT, width=WIDTH, scale=1)
    out = jax.block_until_ready(out)

    ref = _reference(tgt_seq, gaussian, pad_idx=PAD_IDX, eos_idx=EOS_IDX,
                     n_special=N_SPECIAL, height=HEIGHT, width=WIDTH, scale=1)
    assert out.shape == (B, L, D_MODEL) and out.dtype == jnp.float32
    assert jnp.allclose(out, ref, atol=1e-4, rtol=1e-4), "mismatch vs reference"

    # NOTE: nn.Dropout in the module is never applied in forward(), so it is a no-op here.
    print("KERNEL_OK")
</pallas_src>

<mosaic_0001>
module attributes {stable_mosaic.version = 11 : i64} {
  func.func @_pe_kernel(%arg0: i32, %arg1: memref<8x128xi32, #tpu.memory_space<vmem>>, %arg2: memref<3x128xf32, #tpu.memory_space<vmem>>, %arg3: memref<8x128xf32, #tpu.memory_space<vmem>>) attributes {dimension_semantics = [#tpu.dimension_semantics<parallel>], iteration_bounds = array<i64: 1>, scalar_prefetch = 0 : i64, scratch_operands = 0 : i64, tpu.core_type = #tpu.core_type<tc>, window_params = [{transform_indices = @transform_0, window_bounds = array<i64: 8, 128>}, {pipeline_mode = #tpu.pipeline_mode<synchronous>, transform_indices = @transform_1, window_bounds = array<i64: 3, 128>}, {transform_indices = @transform_2, window_bounds = array<i64: 8, 128>}]} {
    %c0 = arith.constant 0 : index
    %c0_0 = arith.constant 0 : index
    %0 = vector.load %arg1[%c0, %c0_0] : memref<8x128xi32, #tpu.memory_space<vmem>>, vector<8x128xi32>
    %c0_i32 = arith.constant 0 : i32
    %1 = vector.broadcast %c0_i32 : i32 to vector<8x128xi32>
    %2 = arith.cmpi ne, %0, %1 : vector<8x128xi32>
    %c2_i32 = arith.constant 2 : i32
    %3 = vector.broadcast %c2_i32 : i32 to vector<8x128xi32>
    %4 = arith.cmpi ne, %0, %3 : vector<8x128xi32>
    %5 = arith.andi %2, %4 : vector<8x128xi1>
    %c3_i32 = arith.constant 3 : i32
    %6 = vector.broadcast %c3_i32 : i32 to vector<8x128xi32>
    %7 = arith.subi %0, %6 : vector<8x128xi32>
    %8 = arith.sitofp %7 : vector<8x128xi32> to vector<8x128xf32>
    %cst = arith.constant 3.200000e+01 : f32
    %9 = vector.broadcast %cst : f32 to vector<8x128xf32>
    %10 = arith.divf %8, %9 : vector<8x128xf32>
    %11 = math.floor %10 : vector<8x128xf32>
    %cst_1 = arith.constant 0.000000e+00 : f32
    %12 = vector.broadcast %cst_1 : f32 to vector<8x128xf32>
    %13 = arith.addf %11, %12 : vector<8x128xf32>
    %cst_2 = arith.constant 3.200000e+01 : f32
    %14 = vector.broadcast %cst_2 : f32 to vector<8x128xf32>
    %15 = arith.mulf %11, %14 : vector<8x128xf32>
    %16 = arith.subf %8, %15 : vector<8x128xf32>
    %cst_3 = arith.constant 0.000000e+00 : f32
    %17 = vector.broadcast %cst_3 : f32 to vector<8x128xf32>
    %18 = arith.addf %16, %17 : vector<8x128xf32>
    %cst_4 = arith.constant 6.250000e-02 : f32
    %19 = vector.broadcast %cst_4 : f32 to vector<8x128xf32>
    %20 = arith.mulf %18, %19 : vector<8x128xf32>
    %cst_5 = arith.constant 1.000000e+00 : f32
    %21 = vector.broadcast %cst_5 : f32 to vector<8x128xf32>
    %22 = arith.subf %20, %21 : vector<8x128xf32>
    %cst_6 = arith.constant 1.000000e-01 : f32
    %23 = vector.broadcast %cst_6 : f32 to vector<8x128xf32>
    %24 = arith.mulf %13, %23 : vector<8x128xf32>
    %cst_7 = arith.constant 1.000000e+00 : f32
    %25 = vector.broadcast %cst_7 : f32 to vector<8x128xf32>
    %26 = arith.subf %24, %25 : vector<8x128xf32>
    %c0_8 = arith.constant 0 : index
    %c0_9 = arith.constant 0 : index
    %27 = vector.load %arg2[%c0_8, %c0_9] : memref<3x128xf32, #tpu.memory_space<vmem>>, vector<3x128xf32>
    %28 = vector.extract_strided_slice %27 {offsets = [0, 0], sizes = [1, 128], strides = [1, 1]} : vector<3x128xf32> to vector<1x128xf32>
    %29 = vector.broadcast %28 : vector<1x128xf32> to vector<8x128xf32>
    %30 = arith.mulf %22, %29 : vector<8x128xf32>
    %31 = vector.extract_strided_slice %27 {offsets = [1, 0], sizes = [1, 128], strides = [1, 1]} : vector<3x128xf32> to vector<1x128xf32>
    %32 = vector.broadcast %31 : vector<1x128xf32> to vector<8x128xf32>
    %33 = arith.mulf %26, %32 : vector<8x128xf32>
    %34 = arith.addf %30, %33 : vector<8x128xf32>
    %35 = vector.extract_strided_slice %27 {offsets = [2, 0], sizes = [1, 128], strides = [1, 1]} : vector<3x128xf32> to vector<1x128xf32>
    %36 = vector.broadcast %35 : vector<1x128xf32> to vector<8x128xf32>
    %37 = arith.addf %34, %36 : vector<8x128xf32>
    %38 = math.sin %37 : vector<8x128xf32>
    %cst_10 = arith.constant 0.000000e+00 : f32
    %39 = vector.broadcast %cst_10 : f32 to vector<8x128xf32>
    %40 = arith.select %5, %38, %39 : vector<8x128xi1>, vector<8x128xf32>
    %c0_11 = arith.constant 0 : index
    %c0_12 = arith.constant 0 : index
    %41 = vector.load %arg3[%c0_11, %c0_12] : memref<8x128xf32, #tpu.memory_space<vmem>>, vector<8x128xf32>
    tpu.vector_store %arg3[%c0_11, %c0_12], %40 {strides = array<i32>} : memref<8x128xf32, #tpu.memory_space<vmem>>, vector<8x128xf32>,
    return
  }
  func.func @transform_0(%arg0: i32) -> (i32, i32) {
    %c0_i32 = arith.constant 0 : i32
    %c0_i32_0 = arith.constant 0 : i32
    return %arg0, %c0_i32 : i32, i32
  }
  func.func @transform_1(%arg0: i32) -> (i32, i32) {
    %c0_i32 = arith.constant 0 : i32
    %c0_i32_0 = arith.constant 0 : i32
    %c0_i32_1 = arith.constant 0 : i32
    return %c0_i32, %c0_i32_0 : i32, i32
  }
  func.func @transform_2(%arg0: i32) -> (i32, i32) {
    %c0_i32 = arith.constant 0 : i32
    %c0_i32_0 = arith.constant 0 : i32
    return %arg0, %c0_i32 : i32, i32
  }
}

</mosaic_0001>

<llo_original>
// kernel: tpu_custom_call.1
$region0: #{tpu_custom_call.1}
  #allocation0 [shape = 'u32[]', space=smem, size = 0x4, offset = 0x4, fixed_abs, tag = 'smem constant byte address 0x4 - core index']
  #allocation1 [shape = 'u32[144,128]{1,0:T(1,128)}', space=vmem, size = 0x12000, scoped, tag = 'internal scratch']
  %s0 = inlined_call_operand.hbm [shape: s32[8,128], index: 0, kind: input, shape index: {}]
  %s1 = inlined_call_operand.hbm [shape: f32[3,128], index: 1, kind: input, shape index: {}]
  %s2 = inlined_call_operand.hbm [shape: f32[8,128], index: 2, kind: output, shape index: {}]
  %s3 = sld [smem:[#allocation0]]
  $region26: #{tpu_custom_call.1} parent=0
    _
  %s5 = ssub.s32 1, %s3
  %s6 = scalar_select 0, %s5, %s3
  $region1: #{tpu_custom_call.1} parent=0
    #allocation2 [shape = 'u8[4096]{0}', space=vmem, size = 0x1000, scoped, tag = 'input window, operand 0, single buffered']
    #allocation3 [shape = 's32[1]{0}', space=sflag, size = 0x4, scoped, tag = 'scoped memory for tpu_custom_call.1']
    #allocation4 [shape = 's32[1]{0}', space=sflag, size = 0x4, scoped, tag = 'scoped memory for tpu_custom_call.1']
    #allocation5 [shape = 'u8[2048]{0}', space=vmem, size = 0x800, scoped, tag = 'input window, operand 1, single buffered']
    #allocation6 [shape = 's32[1]{0}', space=sflag, size = 0x4, scoped, tag = 'scoped memory for tpu_custom_call.1']
    #allocation7 [shape = 'u8[4096]{0}', space=vmem, size = 0x1000, scoped, tag = 'output window, operand 0, single buffered']
    %7 = vsyncpa [#allocation3], 0
    %8 = vsyncpa [#allocation6], 0
    %9 = vsyncpa [#allocation4], 0
    // Predicated region
    $region2: #{tpu_custom_call.1} parent=1 // pred_check
      _
    $region3: #{tpu_custom_call.1} parent=1 // pred_check_branch
      %11 = sbr.rel (0) target = $region5
    $region4: #{tpu_custom_call.1} parent=1 // pred_region
      %s13 = ssub.s32 128, 128
      %14 = vsyncadd [#allocation3], %s13
      %s16 = sshll.u32 [#allocation2], 4
      %s17 = int_to_ptr.vmem [resolvable:$true] %s16
      %19 = dma.hbm_to_vmem [thread:$0]  %s0, 128, %s17, [#allocation3]
    $region5: #{tpu_custom_call.1} parent=1 // pred_fallthru
      _
    // Predicated region
    $region6: #{tpu_custom_call.1} parent=1 // pred_check
      _
    $region7: #{tpu_custom_call.1} parent=1 // pred_check_branch
      %21 = sbr.rel (0) target = $region9
    $region8: #{tpu_custom_call.1} parent=1 // pred_region
      %s23 = ssub.s32 64, 64
      %24 = vsyncadd [#allocation6], %s23
      %s26 = sshll.u32 [#allocation5], 4
      %s27 = int_to_ptr.vmem [resolvable:$true] %s26
      %29 = dma.hbm_to_vmem [thread:$0]  %s1, 64, %s27, [#allocation6]
    $region9: #{tpu_custom_call.1} parent=1 // pred_fallthru
      _
    // Predicated region
    $region10: #{tpu_custom_call.1} parent=1 // pred_check
      _
    $region11: #{tpu_custom_call.1} parent=1 // pred_check_branch
      %31 = sbr.rel (0) target = $region13
    $region12: #{tpu_custom_call.1} parent=1 // pred_region
      %32 = dma.done [#allocation3], 128
    $region13: #{tpu_custom_call.1} parent=1 // pred_fallthru
      _
    // Predicated region
    $region14: #{tpu_custom_call.1} parent=1 // pred_check
      _
    $region15: #{tpu_custom_call.1} parent=1 // pred_check_branch
      %34 = sbr.rel (0) target = $region17
    $region16: #{tpu_custom_call.1} parent=1 // pred_region
      %35 = dma.done [#allocation6], 64
    $region17: #{tpu_custom_call.1} parent=1 // pred_fallthru
      _
    %v36 = vld [vmem:[#allocation2] sm:$0xff]
    %vm37 = vcmp.ne.s32.totalorder %v36, 0
    %vm38 = vcmp.ne.s32.totalorder %v36, 2
    %vm39 = vmand %vm37, %vm38
    %v40 = vsub.s32 %v36, 3
    %v41 = vcvt.s32.f32 %v40
    %v42 = vrcp.pop 32.0
    %v43 = vmul.f32 %v41, %v42
    %v44 = vfloor.f32 %v43
    %v45 = vadd.f32 %v44, 0.0
    %v46 = vmul.f32 %v44, 32.0
    %v47 = vsub.f32 %v41, %v46
    %v48 = vadd.f32 %v47, 0.0
    %v49 = vmul.f32 %v48, 0.0625
    %v50 = vsub.f32 %v49, 1.0
    %v51 = vmul.f32 %v45, 0.1
    %v52 = vsub.f32 %v51, 1.0
    %v53 = vld [vmem:[#allocation5] sm:$0x7]
    %v54 = vlaneseq
    %v55 = vshrl.u32 %v54, 7
    %v56 = vsub.s32 0, %v55
    %v57 = vrot.slane %v53, %v56
    %v58 = vmul.f32 %v50, %v57
    %v59 = vlaneseq
    %v60 = vshrl.u32 %v59, 7
    %v61 = vsub.s32 1, %v60
    %v62 = vrot.slane %v53, %v61
    %v63 = vmul.f32 %v52, %v62
    %v64 = vadd.f32 %v58, %v63
    %v65 = vlaneseq
    %v66 = vshrl.u32 %v65, 7
    %v67 = vsub.s32 2, %v66
    %v68 = vrot.slane %v53, %v67
    %v69 = vadd.f32 %v64, %v68
    %v70 = vand.u32 2147483647, %v69
    %vm71 = vcmp.le.f32.partialorder %v70, 0.7853982
    %vm72 = vcmp.lt.s32.totalorder %v69, 0
    %v73 = vand.u32 %v69, 2139095040
    %v74 = vshrl.u32 %v73, 23
    %v75 = vsub.s32 %v74, 127
    %v76 = vand.u32 2147483647, %v69
    %v77 = vand.u32 %v76, 8388607
    %v78 = vor.u32 %v77, 8388608
    %v79 = vsub.s32 0, %v78
    %v80 = vadd.s32 %v75, 1
    %vm81 = vcmp.gt.s32.totalorder %v80, 0
    %v82 = vsel %vm81, %v80, 0
    %v83 = vshrl.u32 %v82, 5
    %v84 = vand.u32 %v82, 31
    %v85 = vsub.s32 32, %v84
    %v86 = vshrl.u32 683565275, %v85
    %v87 = vshll.u32 683565275, %v84
    %v88 = vshrl.u32 2475754826, %v85
    %v89 = vor.u32 %v87, %v88
    %v90 = vshll.u32 2475754826, %v84
    %v91 = vshrl.u32 2131351028, %v85
    %v92 = vor.u32 %v90, %v91
    %v93 = vshll.u32 2131351028, %v84
    %v94 = vshrl.u32 2102212464, %v85
    %v95 = vor.u32 %v93, %v94
    %v96 = vshll.u32 2102212464, %v84
    %v97 = vshrl.u32 920167782, %v85
    %v98 = vor.u32 %v96, %v97
    %v99 = vshll.u32 920167782, %v84
    %v100 = vshrl.u32 1326507024, %v85
    %v101 = vor.u32 %v99, %v100
    %vm102 = vcmp.lt.s32.totalorder %v83, 1
    %vm103 = vcmp.lt.s32.totalorder %v83, 2
    %vm104 = vcmp.lt.s32.totalorder %v83, 3
    %vm105 = vcmp.lt.s32.totalorder %v83, 4
    %v106 = vsel %vm102, %v86, %v89
    %v107 = vsel %vm105, %v95, 2102212464
    %v108 = vsel %vm104, %v92, %v107
    %v109 = vsel %vm103, %v106, %v108
    %v110 = vsel %vm102, %v89, %v92
    %v111 = vsel %vm105, %v98, 920167782
    %v112 = vsel %vm104, %v95, %v111
    %v113 = vsel %vm103, %v110, %v112
    %v114 = vsel %vm102, %v92, %v95
    %v115 = vsel %vm105, %v101, 1326507024
    %v116 = vsel %vm104, %v98, %v115
    %v117 = vsel %vm103, %v114, %v116
    %v118 = vshll.u32 %v78, 8
    %v119 = vmul.u32.u64.compose %v118, %v117
    %v120 = vextract.low.u32 %v119
    %v121 = vextract.high.u32 %v119
    %v122 = vmul.u32.u64.compose %v118, %v113
    %v123 = vextract.low.u32 %v122
    %v124 = vextract.high.u32 %v122
    %v125 = vmul.u32 %v118, %v109
    %v126 = vadd.s32 %v121, %v123
    %vm127 = vc.u32 %v121, %v123
    %v128 = vadd.s32 %v124, 1
    %v129 = vsel %vm127, %v128, %v124
    %v130 = vadd.s32 %v125, %v129
    %v131 = vadd.s32 %v130, 536870912
    %v132 = vshrl.u32 %v131, 30
    %v133 = vshll.u32 %v132, 30
    %v134 = vsub.s32 %v130, %v133
    %vm135 = vcmp.lt.s32.totalorder %v134, 0
    %v136 = vsub.s32 0, %v134
    %v137 = vsel %vm135, %v136, %v134
    %v138 = vclz %v137
    %v139 = vsub.s32 %v138, 2
    %vm140 = vcmp.gt.s32.totalorder 0, %v139
    %v141 = vsel %vm140, 0, %v139
    %v142 = vsub.s32 32, %v141
    %v143 = vshll.u32 %v134, %v141
    %v144 = vshrl.u32 %v126, %v142
    %v145 = vor.u32 %v143, %v144
    %v146 = vsub.s32 4294967266, %v141
    %v147 = vadd.s32 %v146, 127
    %v148 = vshll.u32 %v147, 23
    %v149 = vor.u32 4788187, %v148
    %v150 = vand.u32 2147483647, %v149
    %v152 = vcvt.s32.f32 %v145
    %v153 = vmul.f32 %v152, %v150
    %v154 = vxor.u32 %v153, 2147483648
    %v155 = vsel %vm72, %v154, %v153
    %v156 = vsub.s32 4, %v132
    %v157 = vsel %vm72, %v156, %v132
    %v158 = vsel %vm71, %v69, %v155
    %v159 = vsel %vm71, 0, %v157
    %v160 = vcosq.f32.pop %v158
    %v161 = vsinq.f32.pop %v158
    %vm162 = vweird.f32 %v69
    %v163 = vadd.s32 %v159, 3
    %v164 = vand.u32 %v163, 3
    %vm165 = vcmp.lt.s32.totalorder %v164, 2
    %vm166 = vcmp.eq.s32.totalorder %v164, 0
    %v167 = vxor.u32 %v161, 2147483648
    %v168 = vsel %vm166, %v160, %v167
    %vm169 = vcmp.eq.s32.totalorder %v164, 2
    %v170 = vxor.u32 %v160, 2147483648
    %v171 = vsel %vm169, %v170, %v161
    %v172 = vsel %vm165, %v168, %v171
    %v173 = vsel %vm162, nan, %v172
    %v174 = vsel %vm39, %v173, 0.0
    %175 = vst [vmem:[#allocation7] sm:$0xff] %v174
    // Predicated region
    $region18: #{tpu_custom_call.1} parent=1 // pred_check
      _
    $region19: #{tpu_custom_call.1} parent=1 // pred_check_branch
      %177 = sbr.rel (0) target = $region21
    $region20: #{tpu_custom_call.1} parent=1 // pred_region
      %s179 = ssub.s32 128, 128
      %180 = vsyncadd [#allocation4], %s179
      %s182 = sshll.u32 [#allocation7], 4
      %s183 = int_to_ptr.vmem [resolvable:$true] %s182
      %185 = dma.vmem_to_hbm [thread:$0]  %s183, 128, %s2, [#allocation4]
    $region21: #{tpu_custom_call.1} parent=1 // pred_fallthru
      _
    // Predicated region
    $region22: #{tpu_custom_call.1} parent=1 // pred_check
      _
    $region23: #{tpu_custom_call.1} parent=1 // pred_check_branch
      %187 = sbr.rel (0) target = $region25
    $region24: #{tpu_custom_call.1} parent=1 // pred_region
      %188 = dma.done [#allocation4], 128
    $region25: #{tpu_custom_call.1} parent=1 // pred_fallthru
      _
    %189 = vsyncpa [#allocation3], 1
    %190 = vsyncpa [#allocation6], 1
    %191 = vsyncpa [#allocation4], 1

</llo_original>
